<compile_context>
chip_gen: v7x
topology: tpu7x:2x2x1
jax: 0.10.0
libtpu: 0.0.40
codegen_flags: <defaults>
</compile_context>

<pallas_src>
import math
import functools

import jax
import jax.numpy as jnp
from jax.experimental import pallas as pl
from jax.experimental.pallas import tpu as pltpu

LANE = 128  # lane width; fc2 output padded 6 -> 128


def _net2_kernel(x_ref, w1_ref, b1_ref, w2_ref, b2_ref, o_ref):
    # fc1: bf16 MXU matmul with f32 accumulation; bias + ReLU in f32 (VPU).
    h = jnp.dot(x_ref[...], w1_ref[...], preferred_element_type=jnp.float32)
    h = jnp.maximum(h + b1_ref[...], 0.0)
    # fc2: activations cast to bf16 for the MXU; weight already bf16 and
    # zero-padded to 128 lanes, so the store below is a full unmasked tile.
    y = jnp.dot(h.astype(jnp.bfloat16), w2_ref[...],
                preferred_element_type=jnp.float32)
    o_ref[...] = y + b2_ref[...]


@functools.partial(jax.jit, static_argnames=("tile_b",))
def net2_forward(x, w1, b1, w2, b2, *, tile_b=512):
    """Net2 forward pass.

    x : (B, 128) f32
    w1: (64, 128) f32, b1: (64,) f32   (PyTorch (out, in) layout)
    w2: (6, 64)   f32, b2: (6,)  f32
    returns (B, 6) f32
    """
    B, in_f = x.shape          # (B, 128)
    hid = w1.shape[0]          # 64
    out_f = w2.shape[0]        # 6

    # --- wrapper-side layout plumbing (not compute) ----------------------
    w1_t = w1.T.astype(jnp.bfloat16)                          # (128, 64)
    b1_2d = b1.reshape(1, hid).astype(jnp.float32)            # (1, 64)
    # Zero-pad fc2 weight/bias to lane width 128.
    w2_t = jnp.zeros((hid, LANE), jnp.bfloat16).at[:, :out_f].set(
        w2.T.astype(jnp.bfloat16))                            # (64, 128)
    b2_2d = jnp.zeros((1, LANE), jnp.float32).at[:, :out_f].set(
        b2.reshape(1, out_f).astype(jnp.float32))             # (1, 128)

    # Batch tiling: pick a tile that is a multiple of 8 and pad B up to it.
    tb = min(tile_b, max(8, ((B + 7) // 8) * 8))
    b_pad = pl.cdiv(B, tb) * tb
    x_p = x.astype(jnp.bfloat16)
    if b_pad != B:
        x_p = jnp.pad(x_p, ((0, b_pad - B), (0, 0)))

    out = pl.pallas_call(
        _net2_kernel,
        out_shape=jax.ShapeDtypeStruct((b_pad, LANE), jnp.float32),
        grid=(b_pad // tb,),
        in_specs=[
            pl.BlockSpec((tb, in_f), lambda i: (i, 0)),     # x: tiled over batch
            pl.BlockSpec((in_f, hid), lambda i: (0, 0)),    # w1: VMEM-resident
            pl.BlockSpec((1, hid), lambda i: (0, 0)),       # b1: VMEM-resident
            pl.BlockSpec((hid, LANE), lambda i: (0, 0)),    # w2: VMEM-resident
            pl.BlockSpec((1, LANE), lambda i: (0, 0)),      # b2: VMEM-resident
        ],
        out_specs=pl.BlockSpec((tb, LANE), lambda i: (i, 0)),
        compiler_params=pltpu.CompilerParams(
            dimension_semantics=("parallel",),
        ),
    )(x_p, w1_t, b1_2d, w2_t, b2_2d)

    return out[:B, :out_f]


def init_params(key):
    """nn.Linear default init: U(-1/sqrt(fan_in), 1/sqrt(fan_in))."""
    k1, k2, k3, k4 = jax.random.split(key, 4)
    bound1 = 1.0 / math.sqrt(128.0)
    bound2 = 1.0 / math.sqrt(64.0)
    w1 = jax.random.uniform(k1, (64, 128), jnp.float32, -bound1, bound1)
    b1 = jax.random.uniform(k2, (64,), jnp.float32, -bound1, bound1)
    w2 = jax.random.uniform(k3, (6, 64), jnp.float32, -bound2, bound2)
    b2 = jax.random.uniform(k4, (6,), jnp.float32, -bound2, bound2)
    return w1, b1, w2, b2


def reference_forward_f32(x, w1, b1, w2, b2):
    h = jnp.maximum(x @ w1.T + b1, 0.0)
    return h @ w2.T + b2


def reference_forward_bf16(x, w1, b1, w2, b2):
    """Replicates the kernel's mixed-precision math exactly."""
    h = jnp.dot(x.astype(jnp.bfloat16), w1.T.astype(jnp.bfloat16),
                preferred_element_type=jnp.float32)
    h = jnp.maximum(h + b1, 0.0)
    y = jnp.dot(h.astype(jnp.bfloat16), w2.T.astype(jnp.bfloat16),
                preferred_element_type=jnp.float32)
    return y + b2


if __name__ == "__main__":
    key = jax.random.PRNGKey(0)
    kx, kp = jax.random.split(key)

    B = 8  # small demo batch (kernel tiles up to 512-row blocks at real sizes)
    x = jax.random.normal(kx, (B, 128), jnp.float32)
    w1, b1, w2, b2 = init_params(kp)

    out = net2_forward(x, w1, b1, w2, b2)
    out = jax.block_until_ready(out)
    assert out.shape == (B, 6)

    ref_bf16 = reference_forward_bf16(x, w1, b1, w2, b2)
    ref_f32 = reference_forward_f32(x, w1, b1, w2, b2)
    assert jnp.allclose(out, ref_bf16, atol=1e-3, rtol=1e-3), \
        "mismatch vs mixed-precision reference"
    assert jnp.allclose(out, ref_f32, atol=2e-2, rtol=2e-2), \
        "mismatch vs f32 reference"

    print("KERNEL_OK")
</pallas_src>

<mosaic_0001>
module attributes {stable_mosaic.version = 11 : i64} {
  func.func @_net2_kernel(%arg0: i32, %arg1: memref<8x128xbf16, #tpu.memory_space<vmem>>, %arg2: memref<128x64xbf16, #tpu.memory_space<vmem>>, %arg3: memref<1x64xf32, #tpu.memory_space<vmem>>, %arg4: memref<64x128xbf16, #tpu.memory_space<vmem>>, %arg5: memref<1x128xf32, #tpu.memory_space<vmem>>, %arg6: memref<8x128xf32, #tpu.memory_space<vmem>>) attributes {dimension_semantics = [#tpu.dimension_semantics<parallel>], iteration_bounds = array<i64: 1>, scalar_prefetch = 0 : i64, scratch_operands = 0 : i64, tpu.core_type = #tpu.core_type<tc>, window_params = [{transform_indices = @transform_0, window_bounds = array<i64: 8, 128>}, {pipeline_mode = #tpu.pipeline_mode<synchronous>, transform_indices = @transform_1, window_bounds = array<i64: 128, 64>}, {pipeline_mode = #tpu.pipeline_mode<synchronous>, transform_indices = @transform_2, window_bounds = array<i64: 1, 64>}, {pipeline_mode = #tpu.pipeline_mode<synchronous>, transform_indices = @transform_3, window_bounds = array<i64: 64, 128>}, {pipeline_mode = #tpu.pipeline_mode<synchronous>, transform_indices = @transform_4, window_bounds = array<i64: 1, 128>}, {transform_indices = @transform_5, window_bounds = array<i64: 8, 128>}]} {
    %c0 = arith.constant 0 : index
    %c0_0 = arith.constant 0 : index
    %0 = vector.load %arg1[%c0, %c0_0] : memref<8x128xbf16, #tpu.memory_space<vmem>>, vector<8x128xbf16>
    %c0_1 = arith.constant 0 : index
    %c0_2 = arith.constant 0 : index
    %1 = vector.load %arg2[%c0_1, %c0_2] : memref<128x64xbf16, #tpu.memory_space<vmem>>, vector<128x64xbf16>
    %cst = arith.constant dense<0.000000e+00> : vector<8x64xf32>
    %2 = tpu.matmul %0, %1, %cst {dimension_numbers = #tpu.dot_dimension_numbers<[1], [0], [0], [1], [0, 0, 1, 1], [], []>} : vector<8x128xbf16>, vector<128x64xbf16>, vector<8x64xf32> -> vector<8x64xf32>
    %c0_3 = arith.constant 0 : index
    %c0_4 = arith.constant 0 : index
    %3 = vector.load %arg3[%c0_3, %c0_4] : memref<1x64xf32, #tpu.memory_space<vmem>>, vector<1x64xf32>
    %4 = vector.broadcast %3 : vector<1x64xf32> to vector<8x64xf32>
    %5 = arith.addf %2, %4 : vector<8x64xf32>
    %cst_5 = arith.constant 0.000000e+00 : f32
    %6 = vector.broadcast %cst_5 : f32 to vector<8x64xf32>
    %7 = arith.maximumf %5, %6 : vector<8x64xf32>
    %8 = arith.truncf %7 : vector<8x64xf32> to vector<8x64xbf16>
    %c0_6 = arith.constant 0 : index
    %c0_7 = arith.constant 0 : index
    %9 = vector.load %arg4[%c0_6, %c0_7] : memref<64x128xbf16, #tpu.memory_space<vmem>>, vector<64x128xbf16>
    %cst_8 = arith.constant dense<0.000000e+00> : vector<8x128xf32>
    %10 = tpu.matmul %8, %9, %cst_8 {dimension_numbers = #tpu.dot_dimension_numbers<[1], [0], [0], [1], [0, 0, 1, 1], [], []>} : vector<8x64xbf16>, vector<64x128xbf16>, vector<8x128xf32> -> vector<8x128xf32>
    %c0_9 = arith.constant 0 : index
    %c0_10 = arith.constant 0 : index
    %11 = vector.load %arg5[%c0_9, %c0_10] : memref<1x128xf32, #tpu.memory_space<vmem>>, vector<1x128xf32>
    %12 = vector.broadcast %11 : vector<1x128xf32> to vector<8x128xf32>
    %13 = arith.addf %10, %12 : vector<8x128xf32>
    %c0_11 = arith.constant 0 : index
    %c0_12 = arith.constant 0 : index
    %14 = vector.load %arg6[%c0_11, %c0_12] : memref<8x128xf32, #tpu.memory_space<vmem>>, vector<8x128xf32>
    tpu.vector_store %arg6[%c0_11, %c0_12], %13 {strides = array<i32>} : memref<8x128xf32, #tpu.memory_space<vmem>>, vector<8x128xf32>,
    return
  }
  func.func @transform_0(%arg0: i32) -> (i32, i32) {
    %c0_i32 = arith.constant 0 : i32
    %c0_i32_0 = arith.constant 0 : i32
    return %arg0, %c0_i32 : i32, i32
  }
  func.func @transform_1(%arg0: i32) -> (i32, i32) {
    %c0_i32 = arith.constant 0 : i32
    %c0_i32_0 = arith.constant 0 : i32
    %c0_i32_1 = arith.constant 0 : i32
    return %c0_i32, %c0_i32_0 : i32, i32
  }
  func.func @transform_2(%arg0: i32) -> (i32, i32) {
    %c0_i32 = arith.constant 0 : i32
    %c0_i32_0 = arith.constant 0 : i32
    %c0_i32_1 = arith.constant 0 : i32
    return %c0_i32, %c0_i32_0 : i32, i32
  }
  func.func @transform_3(%arg0: i32) -> (i32, i32) {
    %c0_i32 = arith.constant 0 : i32
    %c0_i32_0 = arith.constant 0 : i32
    %c0_i32_1 = arith.constant 0 : i32
    return %c0_i32, %c0_i32_0 : i32, i32
  }
  func.func @transform_4(%arg0: i32) -> (i32, i32) {
    %c0_i32 = arith.constant 0 : i32
    %c0_i32_0 = arith.constant 0 : i32
    %c0_i32_1 = arith.constant 0 : i32
    return %c0_i32, %c0_i32_0 : i32, i32
  }
  func.func @transform_5(%arg0: i32) -> (i32, i32) {
    %c0_i32 = arith.constant 0 : i32
    %c0_i32_0 = arith.constant 0 : i32
    return %arg0, %c0_i32 : i32, i32
  }
}

</mosaic_0001>

<llo_original>
// kernel: net2_forward.1
$region0: #{net2_forward.1}
  #allocation0 [shape = 'u32[]', space=smem, size = 0x4, offset = 0x4, fixed_abs, tag = 'smem constant byte address 0x4 - core index']
  #allocation1 [shape = 'u32[144,128]{1,0:T(1,128)}', space=vmem, size = 0x12000, scoped, tag = 'internal scratch']
  %s0 = inlined_call_operand.vmem [shape: bf16[8,128], index: 0, kind: input, shape index: {}]
  %s1 = inlined_call_operand.vmem [shape: bf16[128,64], index: 1, kind: input, shape index: {}]
  %s2 = inlined_call_operand.vmem [shape: f32[1,64], index: 2, kind: input, shape index: {}]
  %s3 = inlined_call_operand.vmem [shape: bf16[64,128], index: 3, kind: input, shape index: {}]
  %s4 = inlined_call_operand.vmem [shape: f32[1,128], index: 4, kind: input, shape index: {}]
  %s5 = inlined_call_operand.hbm [shape: f32[8,128], index: 5, kind: output, shape index: {}]
  %s6 = sld [smem:[#allocation0]]
  $region30: #{net2_forward.1} parent=0
    _
  %s8 = ssub.s32 1, %s6
  %s9 = scalar_select 0, %s8, %s6
  $region1: #{net2_forward.1} parent=0
    #allocation2 [shape = 'u8[4096]{0}', space=vmem, size = 0x1000, scoped, tag = 'output window, operand 0, single buffered']
    #allocation3 [shape = 's32[1]{0}', space=sflag, size = 0x4, scoped, tag = 'scoped memory for net2_forward.1']
    %10 = vsyncpa [#allocation3], 0
    // Predicated region
    $region2: #{net2_forward.1} parent=1 // pred_check
      _
    $region3: #{net2_forward.1} parent=1 // pred_check_branch
      %12 = sbr.rel (0) target = $region5
    $region4: #{net2_forward.1} parent=1 // pred_region
      _
    $region5: #{net2_forward.1} parent=1 // pred_fallthru
      _
    // Predicated region
    $region6: #{net2_forward.1} parent=1 // pred_check
      _
    $region7: #{net2_forward.1} parent=1 // pred_check_branch
      %14 = sbr.rel (0) target = $region9
    $region8: #{net2_forward.1} parent=1 // pred_region
      _
    $region9: #{net2_forward.1} parent=1 // pred_fallthru
      _
    // Predicated region
    $region10: #{net2_forward.1} parent=1 // pred_check
      _
    $region11: #{net2_forward.1} parent=1 // pred_check_branch
      %16 = sbr.rel (0) target = $region13
    $region12: #{net2_forward.1} parent=1 // pred_region
      _
    $region13: #{net2_forward.1} parent=1 // pred_fallthru
      _
    // Predicated region
    $region14: #{net2_forward.1} parent=1 // pred_check
      _
    $region15: #{net2_forward.1} parent=1 // pred_check_branch
      %18 = sbr.rel (0) target = $region17
    $region16: #{net2_forward.1} parent=1 // pred_region
      _
    $region17: #{net2_forward.1} parent=1 // pred_fallthru
      _
    // Predicated region
    $region18: #{net2_forward.1} parent=1 // pred_check
      _
    $region19: #{net2_forward.1} parent=1 // pred_check_branch
      %20 = sbr.rel (0) target = $region21
    $region20: #{net2_forward.1} parent=1 // pred_region
      _
    $region21: #{net2_forward.1} parent=1 // pred_fallthru
      _
    %v22 = vld [vmem:[%s0] sm:$0xf]
    %v23 = vld [vmem:[%s1] sm:$0xf]
    %v24 = vld [vmem:[%s1 + $0x4] sm:$0xf]
    %v25 = vld [vmem:[%s1 + $0x8] sm:$0xf]
    %v26 = vld [vmem:[%s1 + $0xc] sm:$0xf]
    %v27 = vld [vmem:[%s1 + $0x10] sm:$0xf]
    %v28 = vld [vmem:[%s1 + $0x14] sm:$0xf]
    %v29 = vld [vmem:[%s1 + $0x18] sm:$0xf]
    %v30 = vld [vmem:[%s1 + $0x1c] sm:$0xf]
    %v31 = vld [vmem:[%s1 + $0x20] sm:$0xf]
    %v32 = vld [vmem:[%s1 + $0x24] sm:$0xf]
    %v33 = vld [vmem:[%s1 + $0x28] sm:$0xf]
    %v34 = vld [vmem:[%s1 + $0x2c] sm:$0xf]
    %v35 = vld [vmem:[%s1 + $0x30] sm:$0xf]
    %v36 = vld [vmem:[%s1 + $0x34] sm:$0xf]
    %v37 = vld [vmem:[%s1 + $0x38] sm:$0xf]
    %v38 = vld [vmem:[%s1 + $0x3c] sm:$0xf]
    %v39 = vld [vmem:[%s2] sm:$0x1]
    %v41 = vlaneseq
    %v42 = vshrl.u32 %v41, 7
    %v43 = vsub.s32 0, %v42
    %v44 = vrot.slane %v39, %v43
    %v62 = vunpack.c.l.b16 %v23
    %v63 = vunpack.c.l.b16 %v24
    %v64 = vunpack.c.l.b16 %v25
    %v65 = vunpack.c.l.b16 %v26
    %v66 = vunpack.c.l.b16 %v27
    %v67 = vunpack.c.l.b16 %v28
    %v68 = vunpack.c.l.b16 %v29
    %v69 = vunpack.c.l.b16 %v30
    %v70 = vunpack.c.l.b16 %v31
    %v71 = vunpack.c.l.b16 %v32
    %v72 = vunpack.c.l.b16 %v33
    %v73 = vunpack.c.l.b16 %v34
    %v74 = vunpack.c.l.b16 %v35
    %v75 = vunpack.c.l.b16 %v36
    %v76 = vunpack.c.l.b16 %v37
    %v77 = vunpack.c.l.b16 %v38
    %v78 = vpack.c.b16 %v63, %v62
    %v79 = vpack.c.b16 %v65, %v64
    %v80 = vpack.c.b16 %v67, %v66
    %v81 = vpack.c.b16 %v69, %v68
    %v82 = vpack.c.b16 %v71, %v70
    %v83 = vpack.c.b16 %v73, %v72
    %v84 = vpack.c.b16 %v75, %v74
    %v85 = vpack.c.b16 %v77, %v76
    %94 = vmatprep.subr.bf16.mxu0 0
    %95 = vmatpush1.bf16.msra.mxu0 %v78
    %96 = vmatprep.subr.bf16.mxu0 0
    %97 = vmatpush1.bf16.msra.mxu0 %v79
    %98 = vmatprep.subr.bf16.mxu0 0
    %99 = vmatpush1.bf16.msra.mxu0 %v80
    %100 = vmatprep.subr.bf16.mxu0 0
    %101 = vmatpush1.bf16.msra.mxu0 %v81
    %102 = vmatprep.subr.bf16.mxu0 0
    %103 = vmatpush1.bf16.msra.mxu0 %v82
    %104 = vmatprep.subr.bf16.mxu0 0
    %105 = vmatpush1.bf16.msra.mxu0 %v83
    %106 = vmatprep.subr.bf16.mxu0 0
    %107 = vmatpush1.bf16.msra.mxu0 %v84
    %108 = vmatprep.subr.bf16.mxu0 0
    %109 = vmatpush1.bf16.msra.mxu0 %v85
    %110 = vmatprep.subr.bf16.mxu0 0
    %111 = vmatpush1.bf16.msra.mxu0 0
    %112 = vmatprep.subr.bf16.mxu0 0
    %113 = vmatpush1.bf16.msra.mxu0 0
    %114 = vmatprep.subr.bf16.mxu0 0
    %115 = vmatpush1.bf16.msra.mxu0 0
    %116 = vmatprep.subr.bf16.mxu0 0
    %117 = vmatpush1.bf16.msra.mxu0 0
    %118 = vmatprep.subr.bf16.mxu0 0
    %119 = vmatpush1.bf16.msra.mxu0 0
    %120 = vmatprep.subr.bf16.mxu0 0
    %121 = vmatpush1.bf16.msra.mxu0 0
    %122 = vmatprep.subr.bf16.mxu0 0
    %123 = vmatpush1.bf16.msra.mxu0 0
    %124 = vmatprep.subr.bf16.mxu0 0
    %125 = vmatpush1.bf16.msra.mxu0 0
    %126 = vmatprep.mubr.bf16.mxu0 0
    %127 = vmatmul.mubr.bf16.gmra.mrb[0].mxu0 %v22
    %v128 = vpop.f32.mrb[0].mxu0
    %v129 = vadd.f32 %v44, %v128
    %v130 = vpop.f32.mrb[0].mxu0
    %v131 = vpop.f32.mrb[0].mxu0
    %v132 = vpop.f32.mrb[0].mxu0
    %133 = vdwg.mxu0
    %v134 = vmax.f32 %v129, 0.0
    %v135 = vpack.c.bf16 %v134, %v134
    %v136 = vld [vmem:[%s3] sm:$0xf]
    %v137 = vld [vmem:[%s3 + $0x4] sm:$0xf]
    %v138 = vld [vmem:[%s3 + $0x8] sm:$0xf]
    %v139 = vld [vmem:[%s3 + $0xc] sm:$0xf]
    %v140 = vld [vmem:[%s3 + $0x10] sm:$0xf]
    %v141 = vld [vmem:[%s3 + $0x14] sm:$0xf]
    %v142 = vld [vmem:[%s3 + $0x18] sm:$0xf]
    %v143 = vld [vmem:[%s3 + $0x1c] sm:$0xf]
    %v144 = vld [vmem:[%s4] sm:$0x1]
    %v146 = vlaneseq
    %v147 = vshrl.u32 %v146, 7
    %v148 = vsub.s32 0, %v147
    %v149 = vrot.slane %v144, %v148
    %v159 = vunpack.c.l.b16 %v136
    %v160 = vunpack.c.l.b16 %v137
    %v161 = vunpack.c.l.b16 %v138
    %v162 = vunpack.c.l.b16 %v139
    %v163 = vunpack.c.l.b16 %v140
    %v164 = vunpack.c.l.b16 %v141
    %v165 = vunpack.c.l.b16 %v142
    %v166 = vunpack.c.l.b16 %v143
    %v167 = vpack.c.b16 %v160, %v159
    %v168 = vpack.c.b16 %v162, %v161
    %v169 = vpack.c.b16 %v164, %v163
    %v170 = vpack.c.b16 %v166, %v165
    %vm175 = vcmask 523264
    %v177 = vsel %vm175, %v135, 0
    %179 = vmatprep.subr.bf16.mxu0 0
    %180 = vmatpush1.bf16.msra.mxu0 %v167
    %181 = vmatprep.subr.bf16.mxu0 0
    %182 = vmatpush1.bf16.msra.mxu0 %v168
    %183 = vmatprep.subr.bf16.mxu0 0
    %184 = vmatpush1.bf16.msra.mxu0 %v169
    %185 = vmatprep.subr.bf16.mxu0 0
    %186 = vmatpush1.bf16.msra.mxu0 %v170
    %187 = vmatprep.subr.bf16.mxu0 0
    %188 = vmatpush1.bf16.msra.mxu0 0
    %189 = vmatprep.subr.bf16.mxu0 0
    %190 = vmatpush1.bf16.msra.mxu0 0
    %191 = vmatprep.subr.bf16.mxu0 0
    %192 = vmatpush1.bf16.msra.mxu0 0
    %193 = vmatprep.subr.bf16.mxu0 0
    %194 = vmatpush1.bf16.msra.mxu0 0
    %195 = vmatprep.subr.bf16.mxu0 0
    %196 = vmatpush1.bf16.msra.mxu0 0
    %197 = vmatprep.subr.bf16.mxu0 0
    %198 = vmatpush1.bf16.msra.mxu0 0
    %199 = vmatprep.subr.bf16.mxu0 0
    %200 = vmatpush1.bf16.msra.mxu0 0
    %201 = vmatprep.subr.bf16.mxu0 0
    %202 = vmatpush1.bf16.msra.mxu0 0
    %203 = vmatprep.subr.bf16.mxu0 0
    %204 = vmatpush1.bf16.msra.mxu0 0
    %205 = vmatprep.subr.bf16.mxu0 0
    %206 = vmatpush1.bf16.msra.mxu0 0
    %207 = vmatprep.subr.bf16.mxu0 0
    %208 = vmatpush1.bf16.msra.mxu0 0
    %209 = vmatprep.subr.bf16.mxu0 0
    %210 = vmatpush1.bf16.msra.mxu0 0
    %211 = vmatprep.mubr.bf16.mxu0 0
    %212 = vmatmul.mubr.bf16.gmra.mrb[0].mxu0 %v177
    %v213 = vpop.f32.mrb[0].mxu0
    %v214 = vadd.f32 %v149, %v213
    %v215 = vpop.f32.mrb[0].mxu0
    %v216 = vpop.f32.mrb[0].mxu0
    %v217 = vpop.f32.mrb[0].mxu0
    %218 = vdwg.mxu0
    %219 = vst [vmem:[#allocation2] sm:$0xff] %v214
    // Predicated region
    $region22: #{net2_forward.1} parent=1 // pred_check
      _
    $region23: #{net2_forward.1} parent=1 // pred_check_branch
      %221 = sbr.rel (0) target = $region25
    $region24: #{net2_forward.1} parent=1 // pred_region
      %s223 = ssub.s32 128, 128
      %224 = vsyncadd [#allocation3], %s223
      %s226 = sshll.u32 [#allocation2], 4
      %s227 = int_to_ptr.vmem [resolvable:$true] %s226
      %229 = dma.vmem_to_hbm [thread:$0]  %s227, 128, %s5, [#allocation3]
    $region25: #{net2_forward.1} parent=1 // pred_fallthru
      _
    // Predicated region
    $region26: #{net2_forward.1} parent=1 // pred_check
      _
    $region27: #{net2_forward.1} parent=1 // pred_check_branch
      %231 = sbr.rel (0) target = $region29
    $region28: #{net2_forward.1} parent=1 // pred_region
      %232 = dma.done [#allocation3], 128
    $region29: #{net2_forward.1} parent=1 // pred_fallthru
      _
    %233 = vsyncpa [#allocation3], 1

</llo_original>
